<compile_context>
chip_gen: v7x
topology: tpu7x:2x2x1
jax: 0.10.0
libtpu: 0.0.40
codegen_flags: <defaults>
</compile_context>

<pallas_src>
import jax
import jax.numpy as jnp
from jax.experimental import pallas as pl
from jax.experimental.pallas import tpu as pltpu

IN_FEATURES = 784
OUT_FEATURES = 10
OUT_PAD = 128  # lane-dense padded output-feature dim


def _linear_kernel(x_ref, wt_ref, b_ref, o_ref):
    # x_ref:  [B, 784]    VMEM
    # wt_ref: [784, 128]  VMEM  (W^T, columns 10:128 are zero)
    # b_ref:  [1, 128]    VMEM  (bias, entries 10:128 are zero)
    # o_ref:  [B, 128]    VMEM  lane-dense output tile
    acc = jnp.dot(x_ref[...], wt_ref[...], preferred_element_type=jnp.float32)
    o_ref[...] = (acc + b_ref[...]).astype(o_ref.dtype)


def prepare_params(weight, bias):
    """One-time parameter prep (module-init time, not per forward call).

    weight: [10, 784] f32, bias: [10] f32
    Returns wt_pad: [784, 128] f32 (zero-padded W^T), b_pad: [1, 128] f32.
    """
    o, d = weight.shape
    wt_pad = jnp.zeros((d, OUT_PAD), dtype=weight.dtype).at[:, :o].set(weight.T)
    b_pad = jnp.zeros((1, OUT_PAD), dtype=bias.dtype).at[:, :o].set(bias)
    return wt_pad, b_pad


@jax.jit
def mnist_logistic_forward(x, wt_pad, b_pad):
    """x: [B, 784] f32, wt_pad: [784, 128] f32, b_pad: [1, 128] f32 -> [B, 10] f32."""
    B, _ = x.shape
    out_pad = pl.pallas_call(
        _linear_kernel,
        out_shape=jax.ShapeDtypeStruct((B, OUT_PAD), x.dtype),
        in_specs=[
            pl.BlockSpec(memory_space=pltpu.MemorySpace.VMEM),  # x
            pl.BlockSpec(memory_space=pltpu.MemorySpace.VMEM),  # W^T (padded)
            pl.BlockSpec(memory_space=pltpu.MemorySpace.VMEM),  # bias (padded)
        ],
        out_specs=pl.BlockSpec(memory_space=pltpu.MemorySpace.VMEM),
    )(x, wt_pad, b_pad)
    # Pad columns of W/b are zero, so [:, 10:] is exactly zero; slice them off.
    return out_pad[:, :OUT_FEATURES]


if __name__ == "__main__":
    key = jax.random.PRNGKey(0)
    kx, kw, kb = jax.random.split(key, 3)

    bs = 64                      # batch size, as in the tutorial (xb = x_train[0:bs])
    in_features = IN_FEATURES    # 28*28 MNIST pixels
    out_features = OUT_FEATURES

    x = jax.random.normal(kx, (bs, in_features), dtype=jnp.float32)
    # Deterministic init mimicking nn.Linear's default uniform(-1/sqrt(784), 1/sqrt(784)).
    bound = 1.0 / jnp.sqrt(jnp.float32(in_features))
    weight = jax.random.uniform(
        kw, (out_features, in_features), dtype=jnp.float32, minval=-bound, maxval=bound
    )
    bias = jax.random.uniform(
        kb, (out_features,), dtype=jnp.float32, minval=-bound, maxval=bound
    )

    # One-time prep (transpose + lane-dense zero-pad), then the fast forward.
    wt_pad, b_pad = prepare_params(weight, bias)
    wt_pad, b_pad = jax.block_until_ready((wt_pad, b_pad))

    out = mnist_logistic_forward(x, wt_pad, b_pad)
    out = jax.block_until_ready(out)

    # Sanity check against plain-JAX reference.
    ref = x @ weight.T + bias
    assert out.shape == (bs, out_features)
    assert jnp.allclose(out, ref, atol=1e-5, rtol=1e-5)

    print("KERNEL_OK")
</pallas_src>

<mosaic_0001>
module attributes {stable_mosaic.version = 11 : i64} {
  func.func @_linear_kernel(%arg0: memref<64x784xf32, #tpu.memory_space<vmem>>, %arg1: memref<784x128xf32, #tpu.memory_space<vmem>>, %arg2: memref<1x128xf32, #tpu.memory_space<vmem>>, %arg3: memref<64x128xf32, #tpu.memory_space<vmem>>) attributes {dimension_semantics = [], scalar_prefetch = 0 : i64, scratch_operands = 0 : i64, tpu.core_type = #tpu.core_type<tc>} {
    %c0 = arith.constant 0 : index
    %c0_0 = arith.constant 0 : index
    %0 = vector.load %arg0[%c0, %c0_0] : memref<64x784xf32, #tpu.memory_space<vmem>>, vector<64x784xf32>
    %c0_1 = arith.constant 0 : index
    %c0_2 = arith.constant 0 : index
    %1 = vector.load %arg1[%c0_1, %c0_2] : memref<784x128xf32, #tpu.memory_space<vmem>>, vector<784x128xf32>
    %cst = arith.constant dense<0.000000e+00> : vector<64x128xf32>
    %2 = tpu.matmul %0, %1, %cst {dimension_numbers = #tpu.dot_dimension_numbers<[1], [0], [0], [1], [0, 0, 1, 1], [], []>} : vector<64x784xf32>, vector<784x128xf32>, vector<64x128xf32> -> vector<64x128xf32>
    %c0_3 = arith.constant 0 : index
    %c0_4 = arith.constant 0 : index
    %3 = vector.load %arg2[%c0_3, %c0_4] : memref<1x128xf32, #tpu.memory_space<vmem>>, vector<1x128xf32>
    %4 = vector.broadcast %3 : vector<1x128xf32> to vector<64x128xf32>
    %5 = arith.addf %2, %4 : vector<64x128xf32>
    %c0_5 = arith.constant 0 : index
    %c0_6 = arith.constant 0 : index
    %6 = vector.load %arg3[%c0_5, %c0_6] : memref<64x128xf32, #tpu.memory_space<vmem>>, vector<64x128xf32>
    tpu.vector_store %arg3[%c0_5, %c0_6], %5 {strides = array<i32>} : memref<64x128xf32, #tpu.memory_space<vmem>>, vector<64x128xf32>,
    return
  }
}

</mosaic_0001>

<llo_original>
// kernel: mnist_logistic_forward.1
$region0: #{mnist_logistic_forward.1}
  #allocation0 [shape = 'u32[]', space=smem, size = 0x4, offset = 0x4, fixed_abs, tag = 'smem constant byte address 0x4 - core index']
  #allocation1 [shape = 'u32[144,128]{1,0:T(1,128)}', space=vmem, size = 0x12000, scoped, tag = 'internal scratch']
  %s0 = inlined_call_operand.hbm [shape: f32[64,784], index: 0, kind: input, shape index: {}]
  %s1 = inlined_call_operand.hbm [shape: f32[784,128], index: 1, kind: input, shape index: {}]
  %s2 = inlined_call_operand.vmem [shape: f32[1,128], index: 2, kind: input, shape index: {}]
  %s3 = inlined_call_operand.vmem [shape: f32[64,128], index: 3, kind: output, shape index: {}]
  %s4 = sld [smem:[#allocation0]]
  $region30: #{mnist_logistic_forward.1} parent=0
    _
  %s6 = ssub.s32 1, %s4
  %s7 = scalar_select 0, %s6, %s4
  $region1: #{mnist_logistic_forward.1} parent=0
    #allocation2 [shape = 'u8[229376]{0}', space=vmem, size = 0x38000, scoped, tag = 'input window, operand 0, single buffered']
    #allocation3 [shape = 's32[1]{0}', space=sflag, size = 0x4, scoped, tag = 'scoped memory for mnist_logistic_forward.1']
    #allocation4 [shape = 'u8[401408]{0}', space=vmem, size = 0x62000, scoped, tag = 'input window, operand 1, single buffered']
    #allocation5 [shape = 's32[1]{0}', space=sflag, size = 0x4, scoped, tag = 'scoped memory for mnist_logistic_forward.1']
    %8 = vsyncpa [#allocation3], 0
    %9 = vsyncpa [#allocation5], 0
    // Predicated region
    $region2: #{mnist_logistic_forward.1} parent=1 // pred_check
      _
    $region3: #{mnist_logistic_forward.1} parent=1 // pred_check_branch
      %11 = sbr.rel (0) target = $region5
    $region4: #{mnist_logistic_forward.1} parent=1 // pred_region
      %s13 = ssub.s32 7168, 7168
      %14 = vsyncadd [#allocation3], %s13
      %s15 = sshll.u32 [#allocation2], 4
      %s16 = int_to_ptr.vmem [resolvable:$true] %s15
      %21 = dma.hbm_to_vmem [thread:$0]  %s0, 7168, %s16, [#allocation3], 896, 896, 56
    $region5: #{mnist_logistic_forward.1} parent=1 // pred_fallthru
      _
    // Predicated region
    $region6: #{mnist_logistic_forward.1} parent=1 // pred_check
      _
    $region7: #{mnist_logistic_forward.1} parent=1 // pred_check_branch
      %23 = sbr.rel (0) target = $region9
    $region8: #{mnist_logistic_forward.1} parent=1 // pred_region
      %s25 = ssub.s32 12544, 12544
      %26 = vsyncadd [#allocation5], %s25
      %s27 = sshll.u32 [#allocation4], 4
      %s28 = int_to_ptr.vmem [resolvable:$true] %s27
      %33 = dma.hbm_to_vmem [thread:$0]  %s1, 12544, %s28, [#allocation5], 128, 128, 8
    $region9: #{mnist_logistic_forward.1} parent=1 // pred_fallthru
      _
    // Predicated region
    $region10: #{mnist_logistic_forward.1} parent=1 // pred_check
      _
    $region11: #{mnist_logistic_forward.1} parent=1 // pred_check_branch
      %35 = sbr.rel (0) target = $region13
    $region12: #{mnist_logistic_forward.1} parent=1 // pred_region
      _
    $region13: #{mnist_logistic_forward.1} parent=1 // pred_fallthru
      _
    // Predicated region
    $region14: #{mnist_logistic_forward.1} parent=1 // pred_check
      _
    $region15: #{mnist_logistic_forward.1} parent=1 // pred_check_branch
      %37 = sbr.rel (0) target = $region17
    $region16: #{mnist_logistic_forward.1} parent=1 // pred_region
      %38 = dma.done [#allocation3], 7168
    $region17: #{mnist_logistic_forward.1} parent=1 // pred_fallthru
      _
    // Predicated region
    $region18: #{mnist_logistic_forward.1} parent=1 // pred_check
      _
    $region19: #{mnist_logistic_forward.1} parent=1 // pred_check_branch
      %40 = sbr.rel (0) target = $region21
    $region20: #{mnist_logistic_forward.1} parent=1 // pred_region
      %41 = dma.done [#allocation5], 12544
    $region21: #{mnist_logistic_forward.1} parent=1 // pred_fallthru
      _
    %v42 = vld [vmem:[#allocation2] sm:$0xff]
    %v43 = vld [vmem:[#allocation2 + $0x8] sm:$0xff]
    %v44 = vld [vmem:[#allocation2 + $0x10] sm:$0xff]
    %v45 = vld [vmem:[#allocation2 + $0x18] sm:$0xff]
    %v46 = vld [vmem:[#allocation2 + $0x20] sm:$0xff]
    %v47 = vld [vmem:[#allocation2 + $0x28] sm:$0xff]
    %v48 = vld [vmem:[#allocation2 + $0x30] sm:$0xff]
    %v49 = vld [vmem:[#allocation2 + $0x38] sm:$0xff]
    %v50 = vld [vmem:[#allocation2 + $0x40] sm:$0xff]
    %v51 = vld [vmem:[#allocation2 + $0x48] sm:$0xff]
    %v52 = vld [vmem:[#allocation2 + $0x50] sm:$0xff]
    %v53 = vld [vmem:[#allocation2 + $0x58] sm:$0xff]
    %v54 = vld [vmem:[#allocation2 + $0x60] sm:$0xff]
    %v55 = vld [vmem:[#allocation2 + $0x68] sm:$0xff]
    %v56 = vld [vmem:[#allocation2 + $0x70] sm:$0xff]
    %v57 = vld [vmem:[#allocation2 + $0x78] sm:$0xff]
    %v58 = vld [vmem:[#allocation2 + $0x80] sm:$0xff]
    %v59 = vld [vmem:[#allocation2 + $0x88] sm:$0xff]
    %v60 = vld [vmem:[#allocation2 + $0x90] sm:$0xff]
    %v61 = vld [vmem:[#allocation2 + $0x98] sm:$0xff]
    %v62 = vld [vmem:[#allocation2 + $0xa0] sm:$0xff]
    %v63 = vld [vmem:[#allocation2 + $0xa8] sm:$0xff]
    %v64 = vld [vmem:[#allocation2 + $0xb0] sm:$0xff]
    %v65 = vld [vmem:[#allocation2 + $0xb8] sm:$0xff]
    %v66 = vld [vmem:[#allocation2 + $0xc0] sm:$0xff]
    %v67 = vld [vmem:[#allocation2 + $0xc8] sm:$0xff]
    %v68 = vld [vmem:[#allocation2 + $0xd0] sm:$0xff]
    %v69 = vld [vmem:[#allocation2 + $0xd8] sm:$0xff]
    %v70 = vld [vmem:[#allocation2 + $0xe0] sm:$0xff]
    %v71 = vld [vmem:[#allocation2 + $0xe8] sm:$0xff]
    %v72 = vld [vmem:[#allocation2 + $0xf0] sm:$0xff]
    %v73 = vld [vmem:[#allocation2 + $0xf8] sm:$0xff]
    %v74 = vld [vmem:[#allocation2 + $0x100] sm:$0xff]
    %v75 = vld [vmem:[#allocation2 + $0x108] sm:$0xff]
    %v76 = vld [vmem:[#allocation2 + $0x110] sm:$0xff]
    %v77 = vld [vmem:[#allocation2 + $0x118] sm:$0xff]
    %v78 = vld [vmem:[#allocation2 + $0x120] sm:$0xff]
    %v79 = vld [vmem:[#allocation2 + $0x128] sm:$0xff]
    %v80 = vld [vmem:[#allocation2 + $0x130] sm:$0xff]
    %v81 = vld [vmem:[#allocation2 + $0x138] sm:$0xff]
    %v82 = vld [vmem:[#allocation2 + $0x140] sm:$0xff]
    %v83 = vld [vmem:[#allocation2 + $0x148] sm:$0xff]
    %v84 = vld [vmem:[#allocation2 + $0x150] sm:$0xff]
    %v85 = vld [vmem:[#allocation2 + $0x158] sm:$0xff]
    %v86 = vld [vmem:[#allocation2 + $0x160] sm:$0xff]
    %v87 = vld [vmem:[#allocation2 + $0x168] sm:$0xff]
    %v88 = vld [vmem:[#allocation2 + $0x170] sm:$0xff]
    %v89 = vld [vmem:[#allocation2 + $0x178] sm:$0xff]
    %v90 = vld [vmem:[#allocation2 + $0x180] sm:$0xff]
    %v91 = vld [vmem:[#allocation2 + $0x188] sm:$0xff]
    %v92 = vld [vmem:[#allocation2 + $0x190] sm:$0xff]
    %v93 = vld [vmem:[#allocation2 + $0x198] sm:$0xff]
    %v94 = vld [vmem:[#allocation2 + $0x1a0] sm:$0xff]
    %v95 = vld [vmem:[#allocation2 + $0x1a8] sm:$0xff]
    %v96 = vld [vmem:[#allocation2 + $0x1b0] sm:$0xff]
    %v97 = vld [vmem:[#allocation2 + $0x1b8] sm:$0xff]
    %v98 = vld [vmem:[#allocation4] sm:$0xff]
    %v99 = vld [vmem:[#allocation4 + $0x8] sm:$0xff]
    %v100 = vld [vmem:[#allocation4 + $0x10] sm:$0xff]
    %v101 = vld [vmem:[#allocation4 + $0x18] sm:$0xff]
    %v102 = vld [vmem:[#allocation4 + $0x20] sm:$0xff]
    %v103 = vld [vmem:[#allocation4 + $0x28] sm:$0xff]
    %v104 = vld [vmem:[#allocation4 + $0x30] sm:$0xff]
    %v105 = vld [vmem:[#allocation4 + $0x38] sm:$0xff]
    %v106 = vld [vmem:[#allocation4 + $0x40] sm:$0xff]
    %v107 = vld [vmem:[#allocation4 + $0x48] sm:$0xff]
    %v108 = vld [vmem:[#allocation4 + $0x50] sm:$0xff]
    %v109 = vld [vmem:[#allocation4 + $0x58] sm:$0xff]
    %v110 = vld [vmem:[#allocation4 + $0x60] sm:$0xff]
    %v111 = vld [vmem:[#allocation4 + $0x68] sm:$0xff]
    %v112 = vld [vmem:[#allocation4 + $0x70] sm:$0xff]
    %v113 = vld [vmem:[#allocation4 + $0x78] sm:$0xff]
    %v114 = vld [vmem:[#allocation4 + $0x80] sm:$0xff]
    %v115 = vld [vmem:[#allocation4 + $0x88] sm:$0xff]
    %v116 = vld [vmem:[#allocation4 + $0x90] sm:$0xff]
    %v117 = vld [vmem:[#allocation4 + $0x98] sm:$0xff]
    %v118 = vld [vmem:[#allocation4 + $0xa0] sm:$0xff]
    %v119 = vld [vmem:[#allocation4 + $0xa8] sm:$0xff]
    %v120 = vld [vmem:[#allocation4 + $0xb0] sm:$0xff]
    %v121 = vld [vmem:[#allocation4 + $0xb8] sm:$0xff]
    %v122 = vld [vmem:[#allocation4 + $0xc0] sm:$0xff]
    %v123 = vld [vmem:[#allocation4 + $0xc8] sm:$0xff]
    %v124 = vld [vmem:[#allocation4 + $0xd0] sm:$0xff]
    %v125 = vld [vmem:[#allocation4 + $0xd8] sm:$0xff]
    %v126 = vld [vmem:[#allocation4 + $0xe0] sm:$0xff]
    %v127 = vld [vmem:[#allocation4 + $0xe8] sm:$0xff]
    %v128 = vld [vmem:[#allocation4 + $0xf0] sm:$0xff]
    %v129 = vld [vmem:[#allocation4 + $0xf8] sm:$0xff]
    %v130 = vld [vmem:[#allocation4 + $0x100] sm:$0xff]
    %v131 = vld [vmem:[#allocation4 + $0x108] sm:$0xff]
    %v132 = vld [vmem:[#allocation4 + $0x110] sm:$0xff]
    %v133 = vld [vmem:[#allocation4 + $0x118] sm:$0xff]
    %v134 = vld [vmem:[#allocation4 + $0x120] sm:$0xff]
    %v135 = vld [vmem:[#allocation4 + $0x128] sm:$0xff]
    %v136 = vld [vmem:[#allocation4 + $0x130] sm:$0xff]
    %v137 = vld [vmem:[#allocation4 + $0x138] sm:$0xff]
    %v138 = vld [vmem:[#allocation4 + $0x140] sm:$0xff]
    %v139 = vld [vmem:[#allocation4 + $0x148] sm:$0xff]
    %v140 = vld [vmem:[#allocation4 + $0x150] sm:$0xff]
    %v141 = vld [vmem:[#allocation4 + $0x158] sm:$0xff]
    %v142 = vld [vmem:[#allocation4 + $0x160] sm:$0xff]
    %v143 = vld [vmem:[#allocation4 + $0x168] sm:$0xff]
    %v144 = vld [vmem:[#allocation4 + $0x170] sm:$0xff]
    %v145 = vld [vmem:[#allocation4 + $0x178] sm:$0xff]
    %v146 = vld [vmem:[#allocation4 + $0x180] sm:$0xff]
    %v147 = vld [vmem:[#allocation4 + $0x188] sm:$0xff]
    %v148 = vld [vmem:[#allocation4 + $0x190] sm:$0xff]
    %v149 = vld [vmem:[#allocation4 + $0x198] sm:$0xff]
    %v150 = vld [vmem:[#allocation4 + $0x1a0] sm:$0xff]
    %v151 = vld [vmem:[#allocation4 + $0x1a8] sm:$0xff]
    %v152 = vld [vmem:[#allocation4 + $0x1b0] sm:$0xff]
    %v153 = vld [vmem:[#allocation4 + $0x1b8] sm:$0xff]
    %v154 = vld [vmem:[#allocation4 + $0x1c0] sm:$0xff]
    %v155 = vld [vmem:[#allocation4 + $0x1c8] sm:$0xff]
    %v156 = vld [vmem:[#allocation4 + $0x1d0] sm:$0xff]
    %v157 = vld [vmem:[#allocation4 + $0x1d8] sm:$0xff]
    %v158 = vld [vmem:[#allocation4 + $0x1e0] sm:$0xff]
    %v159 = vld [vmem:[#allocation4 + $0x1e8] sm:$0xff]
    %v160 = vld [vmem:[#allocation4 + $0x1f0] sm:$0xff]
    %v161 = vld [vmem:[#allocation4 + $0x1f8] sm:$0xff]
    %v162 = vld [vmem:[#allocation4 + $0x200] sm:$0xff]
    %v163 = vld [vmem:[#allocation4 + $0x208] sm:$0xff]
    %v164 = vld [vmem:[#allocation4 + $0x210] sm:$0xff]
    %v165 = vld [vmem:[#allocation4 + $0x218] sm:$0xff]
    %v166 = vld [vmem:[#allocation4 + $0x220] sm:$0xff]
    %v167 = vld [vmem:[#allocation4 + $0x228] sm:$0xff]
    %v168 = vld [vmem:[#allocation4 + $0x230] sm:$0xff]
    %v169 = vld [vmem:[#allocation4 + $0x238] sm:$0xff]
    %v170 = vld [vmem:[#allocation4 + $0x240] sm:$0xff]
    %v171 = vld [vmem:[#allocation4 + $0x248] sm:$0xff]
    %v172 = vld [vmem:[#allocation4 + $0x250] sm:$0xff]
    %v173 = vld [vmem:[#allocation4 + $0x258] sm:$0xff]
    %v174 = vld [vmem:[#allocation4 + $0x260] sm:$0xff]
    %v175 = vld [vmem:[#allocation4 + $0x268] sm:$0xff]
    %v176 = vld [vmem:[#allocation4 + $0x270] sm:$0xff]
    %v177 = vld [vmem:[#allocation4 + $0x278] sm:$0xff]
    %v178 = vld [vmem:[#allocation4 + $0x280] sm:$0xff]
    %v179 = vld [vmem:[#allocation4 + $0x288] sm:$0xff]
    %v180 = vld [vmem:[#allocation4 + $0x290] sm:$0xff]
    %v181 = vld [vmem:[#allocation4 + $0x298] sm:$0xff]
    %v182 = vld [vmem:[#allocation4 + $0x2a0] sm:$0xff]
    %v183 = vld [vmem:[#allocation4 + $0x2a8] sm:$0xff]
    %v184 = vld [vmem:[#allocation4 + $0x2b0] sm:$0xff]
    %v185 = vld [vmem:[#allocation4 + $0x2b8] sm:$0xff]
    %v186 = vld [vmem:[#allocation4 + $0x2c0] sm:$0xff]
    %v187 = vld [vmem:[#allocation4 + $0x2c8] sm:$0xff]
    %v188 = vld [vmem:[#allocation4 + $0x2d0] sm:$0xff]
    %v189 = vld [vmem:[#allocation4 + $0x2d8] sm:$0xff]
    %v190 = vld [vmem:[#allocation4 + $0x2e0] sm:$0xff]
    %v191 = vld [vmem:[#allocation4 + $0x2e8] sm:$0xff]
    %v192 = vld [vmem:[#allocation4 + $0x2f0] sm:$0xff]
    %v193 = vld [vmem:[#allocation4 + $0x2f8] sm:$0xff]
    %v194 = vld [vmem:[#allocation4 + $0x300] sm:$0xff]
    %v195 = vld [vmem:[#allocation4 + $0x308] sm:$0xff]
    %v196 = vld [vmem:[%s2] sm:$0x1]
    %v198 = vlaneseq
    %v199 = vshrl.u32 %v198, 7
    %v200 = vsub.s32 0, %v199
    %v201 = vrot.slane %v196, %v200
    %vm203 = vcmask 130048
    %v205 = vsel %vm203, %v48, 0
    %v208 = vsel %vm203, %v55, 0
    %v211 = vsel %vm203, %v62, 0
    %v214 = vsel %vm203, %v69, 0
    %v217 = vsel %vm203, %v76, 0
    %v220 = vsel %vm203, %v83, 0
    %v223 = vsel %vm203, %v90, 0
    %v226 = vsel %vm203, %v97, 0
    %228 = vmatprep.subr.mxu0 0.0
    %229 = vmatpush1.msra.mxu0 %v98
    %230 = vmatprep.subr.mxu0 0.0
    %231 = vmatpush1.msra.mxu0 %v99
    %232 = vmatprep.subr.mxu0 0.0
    %233 = vmatpush1.msra.mxu0 %v100
    %234 = vmatprep.subr.mxu0 0.0
    %235 = vmatpush1.msra.mxu0 %v101
    %236 = vmatprep.subr.mxu0 0.0
    %237 = vmatpush1.msra.mxu0 %v102
    %238 = vmatprep.subr.mxu0 0.0
    %239 = vmatpush1.msra.mxu0 %v103
    %240 = vmatprep.subr.mxu0 0.0
    %241 = vmatpush1.msra.mxu0 %v104
    %242 = vmatprep.subr.mxu0 0.0
    %243 = vmatpush1.msra.mxu0 %v105
    %244 = vmatprep.subr.mxu0 0.0
    %245 = vmatpush1.msra.mxu0 %v106
    %246 = vmatprep.subr.mxu0 0.0
    %247 = vmatpush1.msra.mxu0 %v107
    %248 = vmatprep.subr.mxu0 0.0
    %249 = vmatpush1.msra.mxu0 %v108
    %250 = vmatprep.subr.mxu0 0.0
    %251 = vmatpush1.msra.mxu0 %v109
    %252 = vmatprep.subr.mxu0 0.0
    %253 = vmatpush1.msra.mxu0 %v110
    %254 = vmatprep.subr.mxu0 0.0
    %255 = vmatpush1.msra.mxu0 %v111
    %256 = vmatprep.subr.mxu0 0.0
    %257 = vmatpush1.msra.mxu0 %v112
    %258 = vmatprep.subr.mxu0 0.0
    %259 = vmatpush1.msra.mxu0 %v113
    %260 = vmatprep.subr.mxu0 0.0
    %261 = vmatpush1.msra.mxu0 %v114
    %262 = vmatprep.subr.mxu0 0.0
    %263 = vmatpush1.msra.mxu0 %v115
    %264 = vmatprep.subr.mxu0 0.0
    %265 = vmatpush1.msra.mxu0 %v116
    %266 = vmatprep.subr.mxu0 0.0
    %267 = vmatpush1.msra.mxu0 %v117
    %268 = vmatprep.subr.mxu0 0.0
    %269 = vmatpush1.msra.mxu0 %v118
    %270 = vmatprep.subr.mxu0 0.0
    %271 = vmatpush1.msra.mxu0 %v119
    %272 = vmatprep.subr.mxu0 0.0
    %273 = vmatpush1.msra.mxu0 %v120
    %274 = vmatprep.subr.mxu0 0.0
    %275 = vmatpush1.msra.mxu0 %v121
    %276 = vmatprep.subr.mxu0 0.0
    %277 = vmatpush1.msra.mxu0 %v122
    %278 = vmatprep.subr.mxu0 0.0
    %279 = vmatpush1.msra.mxu0 %v123
    %280 = vmatprep.subr.mxu0 0.0
    %281 = vmatpush1.msra.mxu0 %v124
    %282 = vmatprep.subr.mxu0 0.0
    %283 = vmatpush1.msra.mxu0 %v125
    %284 = vmatprep.subr.mxu0 0.0
    %285 = vmatpush1.msra.mxu0 %v126
    %286 = vmatprep.subr.mxu0 0.0
    %287 = vmatpush1.msra.mxu0 %v127
    %288 = vmatprep.subr.mxu0 0.0
    %289 = vmatpush1.msra.mxu0 %v128
    %290 = vmatprep.subr.mxu0 0.0
    %291 = vmatpush1.msra.mxu0 %v129
    %292 = vmatprep.mubr.f32.mxu0 %v43
    %293 = vmatmul.mubr.f32.gmra.mrb[0].mxu0 %v42
    %v294 = vpop.f32.mrb[0].mxu0
    %v295 = vadd.f32 %v201, %v294
    %v296 = vpop.f32.mrb[0].mxu0
    %297 = vmatprep.mubr.f32.mxu0 %v50
    %298 = vmatmul.mubr.f32.gmra.mrb[0].mxu0 %v49
    %v299 = vpop.f32.mrb[0].mxu0
    %v300 = vadd.f32 %v201, %v299
    %v301 = vpop.f32.mrb[0].mxu0
    %302 = vmatprep.mubr.f32.mxu0 %v57
    %303 = vmatmul.mubr.f32.gmra.mrb[0].mxu0 %v56
    %v304 = vpop.f32.mrb[0].mxu0
    %v305 = vadd.f32 %v201, %v304
    %v306 = vpop.f32.mrb[0].mxu0
    %307 = vmatprep.mubr.f32.mxu0 %v64
    %308 = vmatmul.mubr.f32.gmra.mrb[0].mxu0 %v63
    %v309 = vpop.f32.mrb[0].mxu0
    %v310 = vadd.f32 %v201, %v309
    %v311 = vpop.f32.mrb[0].mxu0
    %312 = vmatprep.mubr.f32.mxu0 %v71
    %313 = vmatmul.mubr.f32.gmra.mrb[0].mxu0 %v70
    %v314 = vpop.f32.mrb[0].mxu0
    %v315 = vadd.f32 %v201, %v314
    %v316 = vpop.f32.mrb[0].mxu0
    %317 = vmatprep.mubr.f32.mxu0 %v78
    %318 = vmatmul.mubr.f32.gmra.mrb[0].mxu0 %v77
    %v319 = vpop.f32.mrb[0].mxu0
    %v320 = vadd.f32 %v201, %v319
    %v321 = vpop.f32.mrb[0].mxu0
    %322 = vmatprep.mubr.f32.mxu0 %v85
    %323 = vmatmul.mubr.f32.gmra.mrb[0].mxu0 %v84
    %v324 = vpop.f32.mrb[0].mxu0
    %v325 = vadd.f32 %v201, %v324
    %v326 = vpop.f32.mrb[0].mxu0
    %327 = vmatprep.mubr.f32.mxu0 %v92
    %328 = vmatmul.mubr.f32.gmra.mrb[0].mxu0 %v91
    %v329 = vpop.f32.mrb[0].mxu0
    %v330 = vadd.f32 %v201, %v329
    %v331 = vpop.f32.mrb[0].mxu0
    %332 = vdwg.mxu0
    %333 = vmatprep.subr.mxu0 0.0
    %334 = vmatpush1.msra.mxu0 %v130
    %335 = vmatprep.subr.mxu0 0.0
    %336 = vmatpush1.msra.mxu0 %v131
    %337 = vmatprep.subr.mxu0 0.0
    %338 = vmatpush1.msra.mxu0 %v132
    %339 = vmatprep.subr.mxu0 0.0
    %340 = vmatpush1.msra.mxu0 %v133
    %341 = vmatprep.subr.mxu0 0.0
    %342 = vmatpush1.msra.mxu0 %v134
    %343 = vmatprep.subr.mxu0 0.0
    %344 = vmatpush1.msra.mxu0 %v135
    %345 = vmatprep.subr.mxu0 0.0
    %346 = vmatpush1.msra.mxu0 %v136
    %347 = vmatprep.subr.mxu0 0.0
    %348 = vmatpush1.msra.mxu0 %v137
    %349 = vmatprep.subr.mxu0 0.0
    %350 = vmatpush1.msra.mxu0 %v138
    %351 = vmatprep.subr.mxu0 0.0
    %352 = vmatpush1.msra.mxu0 %v139
    %353 = vmatprep.subr.mxu0 0.0
    %354 = vmatpush1.msra.mxu0 %v140
    %355 = vmatprep.subr.mxu0 0.0
    %356 = vmatpush1.msra.mxu0 %v141
    %357 = vmatprep.subr.mxu0 0.0
    %358 = vmatpush1.msra.mxu0 %v142
    %359 = vmatprep.subr.mxu0 0.0
    %360 = vmatpush1.msra.mxu0 %v143
    %361 = vmatprep.subr.mxu0 0.0
    %362 = vmatpush1.msra.mxu0 %v144
    %363 = vmatprep.subr.mxu0 0.0
    %364 = vmatpush1.msra.mxu0 %v145
    %365 = vmatprep.subr.mxu0 0.0
    %366 = vmatpush1.msra.mxu0 %v146
    %367 = vmatprep.subr.mxu0 0.0
    %368 = vmatpush1.msra.mxu0 %v147
    %369 = vmatprep.subr.mxu0 0.0
    %370 = vmatpush1.msra.mxu0 %v148
    %371 = vmatprep.subr.mxu0 0.0
    %372 = vmatpush1.msra.mxu0 %v149
    %373 = vmatprep.subr.mxu0 0.0
    %374 = vmatpush1.msra.mxu0 %v150
    %375 = vmatprep.subr.mxu0 0.0
    %376 = vmatpush1.msra.mxu0 %v151
    %377 = vmatprep.subr.mxu0 0.0
    %378 = vmatpush1.msra.mxu0 %v152
    %379 = vmatprep.subr.mxu0 0.0
    %380 = vmatpush1.msra.mxu0 %v153
    %381 = vmatprep.subr.mxu0 0.0
    %382 = vmatpush1.msra.mxu0 %v154
    %383 = vmatprep.subr.mxu0 0.0
    %384 = vmatpush1.msra.mxu0 %v155
    %385 = vmatprep.subr.mxu0 0.0
    %386 = vmatpush1.msra.mxu0 %v156
    %387 = vmatprep.subr.mxu0 0.0
    %388 = vmatpush1.msra.mxu0 %v157
    %389 = vmatprep.subr.mxu0 0.0
    %390 = vmatpush1.msra.mxu0 %v158
    %391 = vmatprep.subr.mxu0 0.0
    %392 = vmatpush1.msra.mxu0 %v159
    %393 = vmatprep.subr.mxu0 0.0
    %394 = vmatpush1.msra.mxu0 %v160
    %395 = vmatprep.subr.mxu0 0.0
    %396 = vmatpush1.msra.mxu0 %v161
    %397 = vmatprep.mubr.f32.mxu0 %v45
    %398 = vmatmul.mubr.f32.gmra.mrb[0].mxu0 %v44
    %v399 = vpop.f32.mrb[0].mxu0
    %v400 = vadd.f32 %v295, %v399
    %v401 = vpop.f32.mrb[0].mxu0
    %402 = vmatprep.mubr.f32.mxu0 %v52
    %403 = vmatmul.mubr.f32.gmra.mrb[0].mxu0 %v51
    %v404 = vpop.f32.mrb[0].mxu0
    %v405 = vadd.f32 %v300, %v404
    %v406 = vpop.f32.mrb[0].mxu0
    %407 = vmatprep.mubr.f32.mxu0 %v59
    %408 = vmatmul.mubr.f32.gmra.mrb[0].mxu0 %v58
    %v409 = vpop.f32.mrb[0].mxu0
    %v410 = vadd.f32 %v305, %v409
    %v411 = vpop.f32.mrb[0].mxu0
    %412 = vmatprep.mubr.f32.mxu0 %v66
    %413 = vmatmul.mubr.f32.gmra.mrb[0].mxu0 %v65
    %v414 = vpop.f32.mrb[0].mxu0
    %v415 = vadd.f32 %v310, %v414
    %v416 = vpop.f32.mrb[0].mxu0
    %417 = vmatprep.mubr.f32.mxu0 %v73
    %418 = vmatmul.mubr.f32.gmra.mrb[0].mxu0 %v72
    %v419 = vpop.f32.mrb[0].mxu0
    %v420 = vadd.f32 %v315, %v419
    %v421 = vpop.f32.mrb[0].mxu0
    %422 = vmatprep.mubr.f32.mxu0 %v80
    %423 = vmatmul.mubr.f32.gmra.mrb[0].mxu0 %v79
    %v424 = vpop.f32.mrb[0].mxu0
    %v425 = vadd.f32 %v320, %v424
    %v426 = vpop.f32.mrb[0].mxu0
    %427 = vmatprep.mubr.f32.mxu0 %v87
    %428 = vmatmul.mubr.f32.gmra.mrb[0].mxu0 %v86
    %v429 = vpop.f32.mrb[0].mxu0
    %v430 = vadd.f32 %v325, %v429
    %v431 = vpop.f32.mrb[0].mxu0
    %432 = vmatprep.mubr.f32.mxu0 %v94
    %433 = vmatmul.mubr.f32.gmra.mrb[0].mxu0 %v93
    %v434 = vpop.f32.mrb[0].mxu0
    %v435 = vadd.f32 %v330, %v434
    %v436 = vpop.f32.mrb[0].mxu0
    %437 = vdwg.mxu0
    %438 = vmatprep.subr.mxu0 0.0
    %439 = vmatpush1.msra.mxu0 %v162
    %440 = vmatprep.subr.mxu0 0.0
    %441 = vmatpush1.msra.mxu0 %v163
    %442 = vmatprep.subr.mxu0 0.0
    %443 = vmatpush1.msra.mxu0 %v164
    %444 = vmatprep.subr.mxu0 0.0
    %445 = vmatpush1.msra.mxu0 %v165
    %446 = vmatprep.subr.mxu0 0.0
    %447 = vmatpush1.msra.mxu0 %v166
    %448 = vmatprep.subr.mxu0 0.0
    %449 = vmatpush1.msra.mxu0 %v167
    %450 = vmatprep.subr.mxu0 0.0
    %451 = vmatpush1.msra.mxu0 %v168
    %452 = vmatprep.subr.mxu0 0.0
    %453 = vmatpush1.msra.mxu0 %v169
    %454 = vmatprep.subr.mxu0 0.0
    %455 = vmatpush1.msra.mxu0 %v170
    %456 = vmatprep.subr.mxu0 0.0
    %457 = vmatpush1.msra.mxu0 %v171
    %458 = vmatprep.subr.mxu0 0.0
    %459 = vmatpush1.msra.mxu0 %v172
    %460 = vmatprep.subr.mxu0 0.0
    %461 = vmatpush1.msra.mxu0 %v173
    %462 = vmatprep.subr.mxu0 0.0
    %463 = vmatpush1.msra.mxu0 %v174
    %464 = vmatprep.subr.mxu0 0.0
    %465 = vmatpush1.msra.mxu0 %v175
    %466 = vmatprep.subr.mxu0 0.0
    %467 = vmatpush1.msra.mxu0 %v176
    %468 = vmatprep.subr.mxu0 0.0
    %469 = vmatpush1.msra.mxu0 %v177
    %470 = vmatprep.subr.mxu0 0.0
    %471 = vmatpush1.msra.mxu0 %v178
    %472 = vmatprep.subr.mxu0 0.0
    %473 = vmatpush1.msra.mxu0 %v179
    %474 = vmatprep.subr.mxu0 0.0
    %475 = vmatpush1.msra.mxu0 %v180
    %476 = vmatprep.subr.mxu0 0.0
    %477 = vmatpush1.msra.mxu0 %v181
    %478 = vmatprep.subr.mxu0 0.0
    %479 = vmatpush1.msra.mxu0 %v182
    %480 = vmatprep.subr.mxu0 0.0
    %481 = vmatpush1.msra.mxu0 %v183
    %482 = vmatprep.subr.mxu0 0.0
    %483 = vmatpush1.msra.mxu0 %v184
    %484 = vmatprep.subr.mxu0 0.0
    %485 = vmatpush1.msra.mxu0 %v185
    %486 = vmatprep.subr.mxu0 0.0
    %487 = vmatpush1.msra.mxu0 %v186
    %488 = vmatprep.subr.mxu0 0.0
    %489 = vmatpush1.msra.mxu0 %v187
    %490 = vmatprep.subr.mxu0 0.0
    %491 = vmatpush1.msra.mxu0 %v188
    %492 = vmatprep.subr.mxu0 0.0
    %493 = vmatpush1.msra.mxu0 %v189
    %494 = vmatprep.subr.mxu0 0.0
    %495 = vmatpush1.msra.mxu0 %v190
    %496 = vmatprep.subr.mxu0 0.0
    %497 = vmatpush1.msra.mxu0 %v191
    %498 = vmatprep.subr.mxu0 0.0
    %499 = vmatpush1.msra.mxu0 %v192
    %500 = vmatprep.subr.mxu0 0.0
    %501 = vmatpush1.msra.mxu0 %v193
    %502 = vmatprep.mubr.f32.mxu0 %v47
    %503 = vmatmul.mubr.f32.gmra.mrb[0].mxu0 %v46
    %v504 = vpop.f32.mrb[0].mxu0
    %v505 = vadd.f32 %v400, %v504
    %v506 = vpop.f32.mrb[0].mxu0
    %507 = vmatprep.mubr.f32.mxu0 %v54
    %508 = vmatmul.mubr.f32.gmra.mrb[0].mxu0 %v53
    %v509 = vpop.f32.mrb[0].mxu0
    %v510 = vadd.f32 %v405, %v509
    %v511 = vpop.f32.mrb[0].mxu0
    %512 = vmatprep.mubr.f32.mxu0 %v61
    %513 = vmatmul.mubr.f32.gmra.mrb[0].mxu0 %v60
    %v514 = vpop.f32.mrb[0].mxu0
    %v515 = vadd.f32 %v410, %v514
    %v516 = vpop.f32.mrb[0].mxu0
    %517 = vmatprep.mubr.f32.mxu0 %v68
    %518 = vmatmul.mubr.f32.gmra.mrb[0].mxu0 %v67
    %v519 = vpop.f32.mrb[0].mxu0
    %v520 = vadd.f32 %v415, %v519
    %v521 = vpop.f32.mrb[0].mxu0
    %522 = vmatprep.mubr.f32.mxu0 %v75
    %523 = vmatmul.mubr.f32.gmra.mrb[0].mxu0 %v74
    %v524 = vpop.f32.mrb[0].mxu0
    %v525 = vadd.f32 %v420, %v524
    %v526 = vpop.f32.mrb[0].mxu0
    %527 = vmatprep.mubr.f32.mxu0 %v82
    %528 = vmatmul.mubr.f32.gmra.mrb[0].mxu0 %v81
    %v529 = vpop.f32.mrb[0].mxu0
    %v530 = vadd.f32 %v425, %v529
    %v531 = vpop.f32.mrb[0].mxu0
    %532 = vmatprep.mubr.f32.mxu0 %v89
    %533 = vmatmul.mubr.f32.gmra.mrb[0].mxu0 %v88
    %v534 = vpop.f32.mrb[0].mxu0
    %v535 = vadd.f32 %v430, %v534
    %v536 = vpop.f32.mrb[0].mxu0
    %537 = vmatprep.mubr.f32.mxu0 %v96
    %538 = vmatmul.mubr.f32.gmra.mrb[0].mxu0 %v95
    %v539 = vpop.f32.mrb[0].mxu0
    %v540 = vadd.f32 %v435, %v539
    %v541 = vpop.f32.mrb[0].mxu0
    %542 = vdwg.mxu0
    %543 = vmatprep.subr.mxu0 0.0
    %544 = vmatpush1.msra.mxu0 %v194
    %545 = vmatprep.subr.mxu0 0.0
    %546 = vmatpush1.msra.mxu0 %v195
    %547 = vmatprep.subr.mxu0 0.0
    %548 = vmatpush1.msra.mxu0 0.0
    %549 = vmatprep.subr.mxu0 0.0
    %550 = vmatpush1.msra.mxu0 0.0
    %551 = vmatprep.subr.mxu0 0.0
    %552 = vmatpush1.msra.mxu0 0.0
    %553 = vmatprep.subr.mxu0 0.0
    %554 = vmatpush1.msra.mxu0 0.0
    %555 = vmatprep.subr.mxu0 0.0
    %556 = vmatpush1.msra.mxu0 0.0
    %557 = vmatprep.subr.mxu0 0.0
    %558 = vmatpush1.msra.mxu0 0.0
    %559 = vmatprep.subr.mxu0 0.0
    %560 = vmatpush1.msra.mxu0 0.0
    %561 = vmatprep.subr.mxu0 0.0
    %562 = vmatpush1.msra.mxu0 0.0
    %563 = vmatprep.subr.mxu0 0.0
    %564 = vmatpush1.msra.mxu0 0.0
    %565 = vmatprep.subr.mxu0 0.0
    %566 = vmatpush1.msra.mxu0 0.0
    %567 = vmatprep.subr.mxu0 0.0
    %568 = vmatpush1.msra.mxu0 0.0
    %569 = vmatprep.subr.mxu0 0.0
    %570 = vmatpush1.msra.mxu0 0.0
    %571 = vmatprep.subr.mxu0 0.0
    %572 = vmatpush1.msra.mxu0 0.0
    %573 = vmatprep.subr.mxu0 0.0
    %574 = vmatpush1.msra.mxu0 0.0
    %575 = vmatprep.subr.mxu0 0.0
    %576 = vmatpush1.msra.mxu0 0.0
    %577 = vmatprep.subr.mxu0 0.0
    %578 = vmatpush1.msra.mxu0 0.0
    %579 = vmatprep.subr.mxu0 0.0
    %580 = vmatpush1.msra.mxu0 0.0
    %581 = vmatprep.subr.mxu0 0.0
    %582 = vmatpush1.msra.mxu0 0.0
    %583 = vmatprep.subr.mxu0 0.0
    %584 = vmatpush1.msra.mxu0 0.0
    %585 = vmatprep.subr.mxu0 0.0
    %586 = vmatpush1.msra.mxu0 0.0
    %587 = vmatprep.subr.mxu0 0.0
    %588 = vmatpush1.msra.mxu0 0.0
    %589 = vmatprep.subr.mxu0 0.0
    %590 = vmatpush1.msra.mxu0 0.0
    %591 = vmatprep.subr.mxu0 0.0
    %592 = vmatpush1.msra.mxu0 0.0
    %593 = vmatprep.subr.mxu0 0.0
    %594 = vmatpush1.msra.mxu0 0.0
    %595 = vmatprep.subr.mxu0 0.0
    %596 = vmatpush1.msra.mxu0 0.0
    %597 = vmatprep.subr.mxu0 0.0
    %598 = vmatpush1.msra.mxu0 0.0
    %599 = vmatprep.subr.mxu0 0.0
    %600 = vmatpush1.msra.mxu0 0.0
    %601 = vmatprep.subr.mxu0 0.0
    %602 = vmatpush1.msra.mxu0 0.0
    %603 = vmatprep.subr.mxu0 0.0
    %604 = vmatpush1.msra.mxu0 0.0
    %605 = vmatprep.subr.mxu0 0.0
    %606 = vmatpush1.msra.mxu0 0.0
    %607 = vmatprep.mubr.f32.mxu0 0.0
    %608 = vmatmul.mubr.f32.gmra.mrb[0].mxu0 %v205
    %v609 = vpop.f32.mrb[0].mxu0
    %v610 = vadd.f32 %v505, %v609
    %v611 = vpop.f32.mrb[0].mxu0
    %612 = vmatprep.mubr.f32.mxu0 0.0
    %613 = vmatmul.mubr.f32.gmra.mrb[0].mxu0 %v208
    %v614 = vpop.f32.mrb[0].mxu0
    %v615 = vadd.f32 %v510, %v614
    %v616 = vpop.f32.mrb[0].mxu0
    %617 = vmatprep.mubr.f32.mxu0 0.0
    %618 = vmatmul.mubr.f32.gmra.mrb[0].mxu0 %v211
    %v619 = vpop.f32.mrb[0].mxu0
    %v620 = vadd.f32 %v515, %v619
    %v621 = vpop.f32.mrb[0].mxu0
    %622 = vmatprep.mubr.f32.mxu0 0.0
    %623 = vmatmul.mubr.f32.gmra.mrb[0].mxu0 %v214
    %v624 = vpop.f32.mrb[0].mxu0
    %v625 = vadd.f32 %v520, %v624
    %v626 = vpop.f32.mrb[0].mxu0
    %627 = vmatprep.mubr.f32.mxu0 0.0
    %628 = vmatmul.mubr.f32.gmra.mrb[0].mxu0 %v217
    %v629 = vpop.f32.mrb[0].mxu0
    %v630 = vadd.f32 %v525, %v629
    %v631 = vpop.f32.mrb[0].mxu0
    %632 = vmatprep.mubr.f32.mxu0 0.0
    %633 = vmatmul.mubr.f32.gmra.mrb[0].mxu0 %v220
    %v634 = vpop.f32.mrb[0].mxu0
    %v635 = vadd.f32 %v530, %v634
    %v636 = vpop.f32.mrb[0].mxu0
    %637 = vmatprep.mubr.f32.mxu0 0.0
    %638 = vmatmul.mubr.f32.gmra.mrb[0].mxu0 %v223
    %v639 = vpop.f32.mrb[0].mxu0
    %v640 = vadd.f32 %v535, %v639
    %v641 = vpop.f32.mrb[0].mxu0
    %642 = vmatprep.mubr.f32.mxu0 0.0
    %643 = vmatmul.mubr.f32.gmra.mrb[0].mxu0 %v226
    %v644 = vpop.f32.mrb[0].mxu0
    %v645 = vadd.f32 %v540, %v644
    %v646 = vpop.f32.mrb[0].mxu0
    %647 = vdwg.mxu0
    %648 = vst [vmem:[%s3] sm:$0xff] %v610
    %649 = vst [vmem:[%s3 + $0x8] sm:$0xff] %v615
    %650 = vst [vmem:[%s3 + $0x10] sm:$0xff] %v620
    %651 = vst [vmem:[%s3 + $0x18] sm:$0xff] %v625
    %652 = vst [vmem:[%s3 + $0x20] sm:$0xff] %v630
    %653 = vst [vmem:[%s3 + $0x28] sm:$0xff] %v635
    %654 = vst [vmem:[%s3 + $0x30] sm:$0xff] %v640
    %655 = vst [vmem:[%s3 + $0x38] sm:$0xff] %v645
    // Predicated region
    $region22: #{mnist_logistic_forward.1} parent=1 // pred_check
      _
    $region23: #{mnist_logistic_forward.1} parent=1 // pred_check_branch
      %657 = sbr.rel (0) target = $region25
    $region24: #{mnist_logistic_forward.1} parent=1 // pred_region
      _
    $region25: #{mnist_logistic_forward.1} parent=1 // pred_fallthru
      _
    // Predicated region
    $region26: #{mnist_logistic_forward.1} parent=1 // pred_check
      _
    $region27: #{mnist_logistic_forward.1} parent=1 // pred_check_branch
      %659 = sbr.rel (0) target = $region29
    $region28: #{mnist_logistic_forward.1} parent=1 // pred_region
      _
    $region29: #{mnist_logistic_forward.1} parent=1 // pred_fallthru
      _
    %660 = vsyncpa [#allocation3], 1
    %661 = vsyncpa [#allocation5], 1

</llo_original>
